<compile_context>
chip_gen: v6e
topology: v6e:2x2x1
jax: 0.10.0
libtpu: 0.0.40
codegen_flags: <defaults>
</compile_context>

<pallas_src>
import jax
import jax.numpy as jnp
from jax.experimental import pallas as pl
from jax.experimental.pallas import tpu as pltpu


# ------------------------------- tiling helpers -------------------------------

_PER_STEP_TARGET = 8 * 1024 * 1024          # ~8 MiB of x per grid step
_X_DOUBLE_BUFFER_BUDGET = 32 * 1024 * 1024  # budget for the double-buffered x tile
_VMEM_LIMIT_BYTES = 48 * 1024 * 1024        # explicit scoped-VMEM limit (v7x-safe)
_MIN_ROW_BYTES = 512                        # keep strided-DMA rows >= 512 B


def _prev_divisor(n, d):
    """Largest divisor of n that is <= d (>= 1)."""
    d = max(1, min(d, n))
    while n % d:
        d -= 1
    return d


def _choose_tiling(B, C, HW, dsize):
    """Pick (Bt, T_HW): batch tile and HW tile."""
    per_img_bytes = C * HW * dsize

    # Batch tile sized for ~_PER_STEP_TARGET bytes of input per grid step.
    bt = max(1, _PER_STEP_TARGET // max(per_img_bytes, 1))
    bt = min(bt, B)
    # Megacore: keep at least two batch tiles so both v7x TensorCores get work.
    if B >= 2:
        bt = min(bt, B // 2)
    bt = max(bt, 1)
    if bt >= 8:
        bt = (bt // 8) * 8
    bt = _prev_divisor(B, bt)

    def x_bytes(bt_, thw_):          # double-buffered input tile footprint
        return 2 * bt_ * C * thw_ * dsize

    # Prefer whole-HW (contiguous DMA) blocks: shrink Bt before tiling HW.
    while bt > 1 and x_bytes(bt, HW) > _X_DOUBLE_BUFFER_BUDGET:
        bt = _prev_divisor(B, bt - 1)

    if x_bytes(bt, HW) <= _X_DOUBLE_BUFFER_BUDGET:
        thw = HW
    else:
        max_thw = _X_DOUBLE_BUFFER_BUDGET // (2 * bt * C * dsize)
        min_thw = max(128, _MIN_ROW_BYTES // dsize)   # multiple of 128 by construction
        thw = max(min_thw, (max_thw // 128) * 128)
        thw = min(thw, HW)
    return bt, thw


# --------------------------------- the kernel ---------------------------------

def _make_kernel(Bt, C, Cr, HW, T_HW, nk):
    need_mask = (HW % T_HW) != 0
    inv_hw = 1.0 / float(HW)
    rem = HW - (nk - 1) * T_HW          # valid columns in the ragged last HW tile
    last = nk - 1

    def kernel(x_ref, w1t_ref, w2t_ref, o_ref, sum_acc, max_acc):
        # x_ref   : (Bt, C, T_HW)  native dtype (bf16 stays bf16 in the hot loop)
        # w1t_ref : (C, Cr) f32 ; w2t_ref : (Cr, C) f32
        # o_ref   : (Bt, 1, C)     written only at the last HW step
        # sum_acc / max_acc : (Bt, C) f32 running spatial sum / max
        k = pl.program_id(1)

        x = x_ref[...]

        def _partials(xv):
            ps = jnp.sum(xv, axis=-1, dtype=jnp.float32)      # f32 accumulation
            pm = jnp.max(xv, axis=-1).astype(jnp.float32)     # exact in bf16
            return ps, pm

        if need_mask:
            # Full tiles: plain reduce, no mask work in the hot loop.
            @pl.when(k < last)
            def _full_tiles():
                ps, pm = _partials(x)

                @pl.when(k == 0)
                def _init():
                    sum_acc[...] = ps
                    max_acc[...] = pm

                @pl.when(k > 0)
                def _accum():
                    sum_acc[...] = sum_acc[...] + ps
                    max_acc[...] = jnp.maximum(max_acc[...], pm)

            # Ragged last tile only: mask the Pallas-padded tail.
            # (need_mask implies nk >= 2, so k == last here is never k == 0.)
            @pl.when(k == last)
            def _ragged_tile():
                col = jax.lax.broadcasted_iota(jnp.int32, (Bt, C, T_HW), 2)
                valid = col < rem
                xs = jnp.where(valid, x, jnp.zeros((), x.dtype))
                xm = jnp.where(valid, x, jnp.array(-jnp.inf, x.dtype))
                ps = jnp.sum(xs, axis=-1, dtype=jnp.float32)
                pm = jnp.max(xm, axis=-1).astype(jnp.float32)
                sum_acc[...] = sum_acc[...] + ps
                max_acc[...] = jnp.maximum(max_acc[...], pm)
        else:
            ps, pm = _partials(x)

            @pl.when(k == 0)
            def _init():
                sum_acc[...] = ps
                max_acc[...] = pm

            @pl.when(k > 0)
            def _accum():
                sum_acc[...] = sum_acc[...] + ps
                max_acc[...] = jnp.maximum(max_acc[...], pm)

        # Shared FC + sigmoid once per batch tile, out of the hot HW loop.
        # conv2 is linear: w2@relu(a) + w2@relu(m) == w2@(relu(a)+relu(m)).
        @pl.when(k == last)
        def _finalize():
            avg = sum_acc[...] * inv_hw                # adaptive avg pool -> (Bt, C)
            mx = max_acc[...]                          # adaptive max pool -> (Bt, C)
            w1t = w1t_ref[...]
            h = (jnp.maximum(jnp.dot(avg, w1t, preferred_element_type=jnp.float32), 0.0)
                 + jnp.maximum(jnp.dot(mx, w1t, preferred_element_type=jnp.float32), 0.0))
            y = jnp.dot(h, w2t_ref[...], preferred_element_type=jnp.float32)
            o_ref[:, 0, :] = jax.nn.sigmoid(y).astype(o_ref.dtype)

    return kernel


# --------------------------------- the wrapper ---------------------------------

def channel_attention(x, w1, w2, *, bt=None, t_hw=None):
    """x: (B, C, H, W); w1: (C//16, C, 1, 1); w2: (C, C//16, 1, 1).

    Returns the sigmoid channel-attention map of shape (B, C, 1, 1).
    `bt` / `t_hw` override the automatic tiling (testing only).
    """
    B, C, H, W = x.shape
    Cr = w1.shape[0]
    HW = H * W
    dsize = jnp.dtype(x.dtype).itemsize

    x_flat = x.reshape(B, C, HW)                                   # native dtype
    w1t = jnp.transpose(w1.reshape(Cr, C)).astype(jnp.float32)     # (C, Cr)
    w2t = jnp.transpose(w2.reshape(C, Cr)).astype(jnp.float32)     # (Cr, C)

    auto_bt, auto_thw = _choose_tiling(B, C, HW, dsize)
    Bt = auto_bt if bt is None else bt
    T_HW = auto_thw if t_hw is None else t_hw
    assert B % Bt == 0, "batch tile must divide B"
    assert T_HW == HW or (T_HW % 128 == 0 and T_HW < HW), "bad HW tile"

    nb = B // Bt
    nk = pl.cdiv(HW, T_HW)

    kernel = _make_kernel(Bt, C, Cr, HW, T_HW, nk)

    cost = pl.CostEstimate(
        flops=int(2 * B * C * HW + 6 * B * C * Cr),
        transcendentals=int(B * C),
        bytes_accessed=int(B * C * HW * dsize + B * C * 4 + 2 * C * Cr * 4),
    )

    out = pl.pallas_call(
        kernel,
        out_shape=jax.ShapeDtypeStruct((B, 1, C), jnp.float32),
        grid_spec=pltpu.PrefetchScalarGridSpec(
            num_scalar_prefetch=0,
            grid=(nb, nk),
            in_specs=[
                pl.BlockSpec((Bt, C, T_HW), lambda b, k: (b, 0, k)),
                pl.BlockSpec((C, Cr), lambda b, k: (0, 0)),
                pl.BlockSpec((Cr, C), lambda b, k: (0, 0)),
            ],
            out_specs=pl.BlockSpec((Bt, 1, C), lambda b, k: (b, 0, 0)),
            scratch_shapes=[
                pltpu.VMEM((Bt, C), jnp.float32),   # running spatial sum
                pltpu.VMEM((Bt, C), jnp.float32),   # running spatial max
            ],
        ),
        compiler_params=pltpu.CompilerParams(
            dimension_semantics=("parallel", "arbitrary"),
            vmem_limit_bytes=_VMEM_LIMIT_BYTES,
        ),
        cost_estimate=cost,
    )(x_flat, w1t, w2t)

    return out.reshape(B, C, 1, 1).astype(x.dtype)


# ------------------------------ pure-JAX reference ------------------------------

def channel_attention_ref(x, w1, w2):
    """Pure-JAX reference mirroring the PyTorch module."""
    B, C, H, W = x.shape
    Cr = w1.shape[0]
    w1m = w1.reshape(Cr, C)
    w2m = w2.reshape(C, Cr)

    def fc(p):  # p: (B, C)
        h = jnp.maximum(p @ w1m.T, 0.0)
        return h @ w2m.T

    avg = jnp.mean(x.astype(jnp.float32), axis=(2, 3))
    mx = jnp.max(x.astype(jnp.float32), axis=(2, 3))
    out = jax.nn.sigmoid(fc(avg) + fc(mx))
    return out.reshape(B, C, 1, 1).astype(x.dtype)


if __name__ == "__main__":
    key = jax.random.PRNGKey(0)
    kx, k1, k2 = jax.random.split(key, 3)

    # Test 1: f32, whole-HW contiguous block path (in_planes=32 -> hidden = 2).
    B, C, H, W = 2, 32, 16, 16
    Cr = C // 16
    x = jax.random.normal(kx, (B, C, H, W), dtype=jnp.float32)
    # Conv2d weight shapes: (out_channels, in_channels, 1, 1), no bias.
    w1 = jax.random.normal(k1, (Cr, C, 1, 1), dtype=jnp.float32) * 0.1
    w2 = jax.random.normal(k2, (C, Cr, 1, 1), dtype=jnp.float32) * 0.1
    out = jax.block_until_ready(channel_attention(x, w1, w2))
    ref = channel_attention_ref(x, w1, w2)
    assert out.shape == (B, C, 1, 1)
    assert jnp.allclose(out, ref, atol=1e-5, rtol=1e-5)

    # Test 2: bf16 input + forced HW tiling with a ragged last tile
    # (exercises the running accumulators and the masked-tail path).
    H2, W2 = 20, 20                        # HW = 400, T_HW = 256 -> 2 tiles, rem = 144
    xb = jax.random.normal(kx, (B, C, H2, W2), dtype=jnp.bfloat16)
    outb = jax.block_until_ready(channel_attention(xb, w1, w2, bt=1, t_hw=256))
    refb = channel_attention_ref(xb, w1, w2)
    assert outb.shape == (B, C, 1, 1)
    assert jnp.allclose(outb.astype(jnp.float32), refb.astype(jnp.float32),
                        atol=2e-2, rtol=2e-2)

    print("KERNEL_OK")
</pallas_src>

<mosaic_0001>
module attributes {stable_mosaic.version = 11 : i64} {
  func.func @kernel(%arg0: i32, %arg1: i32, %arg2: memref<1x32x256xf32, #tpu.memory_space<vmem>>, %arg3: memref<32x2xf32, #tpu.memory_space<vmem>>, %arg4: memref<2x32xf32, #tpu.memory_space<vmem>>, %arg5: memref<1x1x32xf32, #tpu.memory_space<vmem>>, %arg6: memref<1x32xf32, #tpu.memory_space<vmem>>, %arg7: memref<1x32xf32, #tpu.memory_space<vmem>>) attributes {dimension_semantics = [#tpu.dimension_semantics<parallel>, #tpu.dimension_semantics<arbitrary>], iteration_bounds = array<i64: 2, 1>, scalar_prefetch = 0 : i64, scratch_operands = 2 : i64, tpu.core_type = #tpu.core_type<tc>, window_params = [{transform_indices = @transform_0, window_bounds = array<i64: 1, 32, 256>}, {pipeline_mode = #tpu.pipeline_mode<synchronous>, transform_indices = @transform_1, window_bounds = array<i64: 32, 2>}, {pipeline_mode = #tpu.pipeline_mode<synchronous>, transform_indices = @transform_2, window_bounds = array<i64: 2, 32>}, {transform_indices = @transform_3, window_bounds = array<i64: 1, 1, 32>}]} {
    %c0 = arith.constant 0 : index
    %c0_0 = arith.constant 0 : index
    %c0_1 = arith.constant 0 : index
    %0 = vector.load %arg2[%c0, %c0_0, %c0_1] : memref<1x32x256xf32, #tpu.memory_space<vmem>>, vector<1x32x256xf32>
    %cst = arith.constant dense<0.000000e+00> : vector<1x32xf32>
    %1 = vector.multi_reduction <add>, %0, %cst [2] : vector<1x32x256xf32> to vector<1x32xf32>
    %cst_2 = arith.constant dense<0xFF800000> : vector<1x32xf32>
    %2 = vector.multi_reduction <maximumf>, %0, %cst_2 [2] : vector<1x32x256xf32> to vector<1x32xf32>
    %c0_i32 = arith.constant 0 : i32
    %3 = arith.cmpi eq, %arg1, %c0_i32 : i32
    %4 = arith.extui %3 : i1 to i32
    %c0_i32_3 = arith.constant 0 : i32
    %5 = arith.cmpi ne, %4, %c0_i32_3 : i32
    scf.if %5 {
      %c0_8 = arith.constant 0 : index
      %c0_9 = arith.constant 0 : index
      %12 = vector.load %arg6[%c0_8, %c0_9] : memref<1x32xf32, #tpu.memory_space<vmem>>, vector<1x32xf32>
      tpu.vector_store %arg6[%c0_8, %c0_9], %1 {strides = array<i32>} : memref<1x32xf32, #tpu.memory_space<vmem>>, vector<1x32xf32>,
      %c0_10 = arith.constant 0 : index
      %c0_11 = arith.constant 0 : index
      %13 = vector.load %arg7[%c0_10, %c0_11] : memref<1x32xf32, #tpu.memory_space<vmem>>, vector<1x32xf32>
      tpu.vector_store %arg7[%c0_10, %c0_11], %2 {strides = array<i32>} : memref<1x32xf32, #tpu.memory_space<vmem>>, vector<1x32xf32>,
    } else {
    }
    %c0_i32_4 = arith.constant 0 : i32
    %6 = arith.cmpi sgt, %arg1, %c0_i32_4 : i32
    %7 = arith.extui %6 : i1 to i32
    %c0_i32_5 = arith.constant 0 : i32
    %8 = arith.cmpi ne, %7, %c0_i32_5 : i32
    scf.if %8 {
      %c0_8 = arith.constant 0 : index
      %c0_9 = arith.constant 0 : index
      %12 = vector.load %arg6[%c0_8, %c0_9] : memref<1x32xf32, #tpu.memory_space<vmem>>, vector<1x32xf32>
      %13 = arith.addf %12, %1 : vector<1x32xf32>
      %c0_10 = arith.constant 0 : index
      %c0_11 = arith.constant 0 : index
      %14 = vector.load %arg6[%c0_10, %c0_11] : memref<1x32xf32, #tpu.memory_space<vmem>>, vector<1x32xf32>
      tpu.vector_store %arg6[%c0_10, %c0_11], %13 {strides = array<i32>} : memref<1x32xf32, #tpu.memory_space<vmem>>, vector<1x32xf32>,
      %c0_12 = arith.constant 0 : index
      %c0_13 = arith.constant 0 : index
      %15 = vector.load %arg7[%c0_12, %c0_13] : memref<1x32xf32, #tpu.memory_space<vmem>>, vector<1x32xf32>
      %16 = arith.maximumf %15, %2 : vector<1x32xf32>
      %c0_14 = arith.constant 0 : index
      %c0_15 = arith.constant 0 : index
      %17 = vector.load %arg7[%c0_14, %c0_15] : memref<1x32xf32, #tpu.memory_space<vmem>>, vector<1x32xf32>
      tpu.vector_store %arg7[%c0_14, %c0_15], %16 {strides = array<i32>} : memref<1x32xf32, #tpu.memory_space<vmem>>, vector<1x32xf32>,
    } else {
    }
    %c0_i32_6 = arith.constant 0 : i32
    %9 = arith.cmpi eq, %arg1, %c0_i32_6 : i32
    %10 = arith.extui %9 : i1 to i32
    %c0_i32_7 = arith.constant 0 : i32
    %11 = arith.cmpi ne, %10, %c0_i32_7 : i32
    scf.if %11 {
      %c0_8 = arith.constant 0 : index
      %c0_9 = arith.constant 0 : index
      %12 = vector.load %arg6[%c0_8, %c0_9] : memref<1x32xf32, #tpu.memory_space<vmem>>, vector<1x32xf32>
      %cst_10 = arith.constant 3.906250e-03 : f32
      %13 = vector.broadcast %cst_10 : f32 to vector<1x32xf32>
      %14 = arith.mulf %12, %13 : vector<1x32xf32>
      %c0_11 = arith.constant 0 : index
      %c0_12 = arith.constant 0 : index
      %15 = vector.load %arg7[%c0_11, %c0_12] : memref<1x32xf32, #tpu.memory_space<vmem>>, vector<1x32xf32>
      %c0_13 = arith.constant 0 : index
      %c0_14 = arith.constant 0 : index
      %16 = vector.load %arg3[%c0_13, %c0_14] : memref<32x2xf32, #tpu.memory_space<vmem>>, vector<32x2xf32>
      %cst_15 = arith.constant dense<0.000000e+00> : vector<1x2xf32>
      %17 = tpu.matmul %14, %16, %cst_15 {dimension_numbers = #tpu.dot_dimension_numbers<[1], [0], [0], [1], [0, 0, 1, 1], [], []>} : vector<1x32xf32>, vector<32x2xf32>, vector<1x2xf32> -> vector<1x2xf32>
      %cst_16 = arith.constant 0.000000e+00 : f32
      %18 = vector.broadcast %cst_16 : f32 to vector<1x2xf32>
      %19 = arith.maximumf %17, %18 : vector<1x2xf32>
      %cst_17 = arith.constant dense<0.000000e+00> : vector<1x2xf32>
      %20 = tpu.matmul %15, %16, %cst_17 {dimension_numbers = #tpu.dot_dimension_numbers<[1], [0], [0], [1], [0, 0, 1, 1], [], []>} : vector<1x32xf32>, vector<32x2xf32>, vector<1x2xf32> -> vector<1x2xf32>
      %cst_18 = arith.constant 0.000000e+00 : f32
      %21 = vector.broadcast %cst_18 : f32 to vector<1x2xf32>
      %22 = arith.maximumf %20, %21 : vector<1x2xf32>
      %23 = arith.addf %19, %22 : vector<1x2xf32>
      %c0_19 = arith.constant 0 : index
      %c0_20 = arith.constant 0 : index
      %24 = vector.load %arg4[%c0_19, %c0_20] : memref<2x32xf32, #tpu.memory_space<vmem>>, vector<2x32xf32>
      %cst_21 = arith.constant dense<0.000000e+00> : vector<1x32xf32>
      %25 = tpu.matmul %23, %24, %cst_21 {dimension_numbers = #tpu.dot_dimension_numbers<[1], [0], [0], [1], [0, 0, 1, 1], [], []>} : vector<1x2xf32>, vector<2x32xf32>, vector<1x32xf32> -> vector<1x32xf32>
      %26 = arith.negf %25 : vector<1x32xf32>
      %27 = math.exp %26 : vector<1x32xf32>
      %cst_22 = arith.constant 1.000000e+00 : f32
      %28 = vector.broadcast %cst_22 : f32 to vector<1x32xf32>
      %29 = arith.addf %28, %27 : vector<1x32xf32>
      %30 = arith.divf %28, %29 : vector<1x32xf32>
      %c0_23 = arith.constant 0 : index
      %c0_24 = arith.constant 0 : index
      %c0_25 = arith.constant 0 : index
      %31 = vector.load %arg5[%c0_23, %c0_24, %c0_25] : memref<1x1x32xf32, #tpu.memory_space<vmem>>, vector<1x1x32xf32>
      %32 = vector.shape_cast %31 : vector<1x1x32xf32> to vector<1x32xf32>
      %33 = vector.shape_cast %30 : vector<1x32xf32> to vector<1x1x32xf32>
      tpu.vector_store %arg5[%c0_23, %c0_24, %c0_25], %33 {strides = array<i32>} : memref<1x1x32xf32, #tpu.memory_space<vmem>>, vector<1x1x32xf32>,
    } else {
    }
    return
  }
  func.func @transform_0(%arg0: i32, %arg1: i32) -> (i32, i32, i32) {
    %c0_i32 = arith.constant 0 : i32
    %c0_i32_0 = arith.constant 0 : i32
    return %arg0, %c0_i32, %arg1 : i32, i32, i32
  }
  func.func @transform_1(%arg0: i32, %arg1: i32) -> (i32, i32) {
    %c0_i32 = arith.constant 0 : i32
    %c0_i32_0 = arith.constant 0 : i32
    %c0_i32_1 = arith.constant 0 : i32
    return %c0_i32, %c0_i32_0 : i32, i32
  }
  func.func @transform_2(%arg0: i32, %arg1: i32) -> (i32, i32) {
    %c0_i32 = arith.constant 0 : i32
    %c0_i32_0 = arith.constant 0 : i32
    %c0_i32_1 = arith.constant 0 : i32
    return %c0_i32, %c0_i32_0 : i32, i32
  }
  func.func @transform_3(%arg0: i32, %arg1: i32) -> (i32, i32, i32) {
    %c0_i32 = arith.constant 0 : i32
    %c0_i32_0 = arith.constant 0 : i32
    %c0_i32_1 = arith.constant 0 : i32
    return %arg0, %c0_i32, %c0_i32_0 : i32, i32, i32
  }
}

</mosaic_0001>

<llo_original>
// kernel: tpu_custom_call.1
$region0: #{tpu_custom_call.1}
  #allocation0 [shape = 'u32[]', space=smem, size = 0x4, offset = 0x4, fixed_abs, tag = 'smem constant byte address 0x4 - core index']
  #allocation1 [shape = 'u32[144,128]{1,0:T(1,128)}', space=vmem, size = 0x12000, scoped, tag = 'internal scratch']
  #allocation2 [shape = 'f32[1,32]{1,0:T(1,128)}', space=vmem, size = 0x200, scoped, tag = 'scratch operand']
  #allocation3 [shape = 'f32[1,32]{1,0:T(1,128)}', space=vmem, size = 0x200, scoped, tag = 'scratch operand']
  %s0 = inlined_call_operand.hbm [shape: f32[2,32,256], index: 0, kind: input, shape index: {}]
  %s1 = inlined_call_operand.vmem [shape: f32[32,2], index: 1, kind: input, shape index: {}]
  %s2 = inlined_call_operand.vmem [shape: f32[2,32], index: 2, kind: input, shape index: {}]
  %s3 = inlined_call_operand.hbm [shape: f32[2,1,32], index: 3, kind: output, shape index: {}]
  %s4 = sld [smem:[#allocation0]]
  $region61: #{tpu_custom_call.1} parent=0
    _
  %s6 = ssub.s32 1, %s4
  %s7 = scalar_select 0, %s6, %s4
  $region1: #{tpu_custom_call.1} parent=0
    #allocation4 [shape = 'u8[65536]{0}', space=vmem, size = 0x10000, scoped, tag = 'input window, operand 0']
    #allocation5 [shape = 's32[2]{0}', space=sflag, size = 0x8, scoped, tag = 'scoped memory for tpu_custom_call.1']
    #allocation6 [shape = 's32[2]{0}', space=sflag, size = 0x8, scoped, tag = 'scoped memory for tpu_custom_call.1']
    #allocation7 [shape = 'u8[1024]{0}', space=vmem, size = 0x400, scoped, tag = 'output window, operand 0']
    %8 = vsyncpa [#allocation5], 0
    %s9 = scalar_lea.sflag [#allocation5], 1
    %10 = vsyncpa %s9, 0
    %11 = vsyncpa [#allocation6], 0
    %s12 = scalar_lea.sflag [#allocation6], 1
    %13 = vsyncpa %s12, 0
    loop: start=0, step=1, limit=4
    $region2: #{tpu_custom_call.1} parent=1 // loop_pre_header
      _
    $region3: #{tpu_custom_call.1} parent=1 // loop_header
      %s15 = sphi 0, %s19
      %p16 = scmp.ge.s32.totalorder %s15, 4
      %s22 = sphi 0, %s34
      %s23 = sphi 0, %s30
      %s24 = sphi 0, %s22
      %s25 = sphi 0, %s23
      %s26 = sphi 0, %s24
      %s27 = sphi 0, %s25
      %s39 = sphi 0, %s41
      %s42 = sphi 0, %s39
      %s43 = sphi 0, %s42
      %s59 = sphi 0, %s43
      %s63 = sphi 0, %s63
      %s65 = sphi 0, %s63
      %s66 = sphi 0, %s65
      %s80 = sphi 0, %s66
      %s84 = sphi 0, %s84
      %s86 = sphi 0, %s84
      %s87 = sphi 0, %s86
      %s101 = sphi 0, %s87
      %s107 = sphi 0, %s109
      %s110 = sphi 0, %s107
      %s111 = sphi 0, %s110
      %s127 = sphi 0, %s111
    $region4: #{tpu_custom_call.1} parent=1 // loop_header_branch
      %18 = sbr.rel (%p16) target = $region8
    $region5: #{tpu_custom_call.1} parent=1 // loop_body
      %s20 = ssub.s32 %s15, 1
      %s21 = ssub.s32 %s15, 2
      %s28 = sadd.s32 1, %s23
      %p29 = scmp.ge.s32.totalorder %s28, 1
      %s30 = scalar_select %p29, 0, %s28
      %s31 = sadd.s32 1, %s22
      %s32 = scalar_select %p29, %s31, %s22
      %p33 = scmp.ge.s32.totalorder %s32, 2
      %s34 = scalar_select %p33, 0, %s32
      %s35 = ssub.s32 %s22, %s34
      %s36 = ssub.s32 %s23, %s30
      %s37 = sor.u32 %s35, %s36
      %p38 = scmp.eq.s32.totalorder %s37, 0
      %s40 = sadd.s32 %s39, 1
      %s41 = scalar_select %p38, %s39, %s40
      %p44 = pneg %p38
      %p45 = scmp.eq.s32.totalorder %s15, 1
      %p46 = por %p44, %p45
      %p47 = scmp.ne.s32.totalorder %s39, %s42
      %p48 = scmp.eq.s32.totalorder %s15, 0
      %p49 = por %p47, %p48
      %p50 = scmp.ne.s32.totalorder %s39, %s42
      %p51 = scmp.eq.s32.totalorder %s20, 1
      %p52 = por %p50, %p51
      %p53 = scmp.ne.s32.totalorder %s42, %s43
      %p54 = scmp.eq.s32.totalorder %s20, 0
      %p55 = por %p53, %p54
      %p56 = scmp.ne.s32.totalorder %s42, %s43
      %p57 = scmp.eq.s32.totalorder %s21, 1
      %p58 = por %p56, %p57
      %p60 = scmp.ne.s32.totalorder %s43, %s59
      %p61 = scmp.eq.s32.totalorder %s21, 0
      %p62 = por %p60, %p61
      %s64 = sadd.s32 %s63, 1
      %p67 = scmp.eq.s32.totalorder %s15, 1
      %p68 = scmp.ne.s32.totalorder %s63, %s65
      %p69 = scmp.eq.s32.totalorder %s15, 0
      %p70 = por %p68, %p69
      %p71 = scmp.ne.s32.totalorder %s63, %s65
      %p72 = scmp.eq.s32.totalorder %s20, 1
      %p73 = por %p71, %p72
      %p74 = scmp.ne.s32.totalorder %s65, %s66
      %p75 = scmp.eq.s32.totalorder %s20, 0
      %p76 = por %p74, %p75
      %p77 = scmp.ne.s32.totalorder %s65, %s66
      %p78 = scmp.eq.s32.totalorder %s21, 1
      %p79 = por %p77, %p78
      %p81 = scmp.ne.s32.totalorder %s66, %s80
      %p82 = scmp.eq.s32.totalorder %s21, 0
      %p83 = por %p81, %p82
      %s85 = sadd.s32 %s84, 1
      %p88 = scmp.eq.s32.totalorder %s15, 1
      %p89 = scmp.ne.s32.totalorder %s84, %s86
      %p90 = scmp.eq.s32.totalorder %s15, 0
      %p91 = por %p89, %p90
      %p92 = scmp.ne.s32.totalorder %s84, %s86
      %p93 = scmp.eq.s32.totalorder %s20, 1
      %p94 = por %p92, %p93
      %p95 = scmp.ne.s32.totalorder %s86, %s87
      %p96 = scmp.eq.s32.totalorder %s20, 0
      %p97 = por %p95, %p96
      %p98 = scmp.ne.s32.totalorder %s86, %s87
      %p99 = scmp.eq.s32.totalorder %s21, 1
      %p100 = por %p98, %p99
      %p102 = scmp.ne.s32.totalorder %s87, %s101
      %p103 = scmp.eq.s32.totalorder %s21, 0
      %p104 = por %p102, %p103
      %s105 = ssub.s32 %s22, %s34
      %p106 = scmp.eq.s32.totalorder %s105, 0
      %s108 = sadd.s32 %s107, 1
      %s109 = scalar_select %p106, %s107, %s108
      %p112 = pneg %p106
      %p113 = scmp.eq.s32.totalorder %s15, 1
      %p114 = por %p112, %p113
      %p115 = scmp.ne.s32.totalorder %s107, %s110
      %p116 = scmp.eq.s32.totalorder %s15, 0
      %p117 = por %p115, %p116
      %p118 = scmp.ne.s32.totalorder %s107, %s110
      %p119 = scmp.eq.s32.totalorder %s20, 1
      %p120 = por %p118, %p119
      %p121 = scmp.ne.s32.totalorder %s110, %s111
      %p122 = scmp.eq.s32.totalorder %s20, 0
      %p123 = por %p121, %p122
      %p124 = scmp.ne.s32.totalorder %s110, %s111
      %p125 = scmp.eq.s32.totalorder %s21, 1
      %p126 = por %p124, %p125
      %p128 = scmp.ne.s32.totalorder %s111, %s127
      %p129 = scmp.eq.s32.totalorder %s21, 0
      %p130 = por %p128, %p129
      %p131 = scmp.le.s32.totalorder 1, %s15
      %p132 = scmp.lt.s32.totalorder %s15, 3
      %p133 = pnand %p131, %p132
      %p134 = pneg %p133
      // Predicated region
      $region9: #{tpu_custom_call.1} parent=5 // pred_check
        _
      $region10: #{tpu_custom_call.1} parent=5 // pred_check_branch
        %136 = sbr.rel (%p133) target = $region12
      $region11: #{tpu_custom_call.1} parent=5 // pred_region
        %s137 = ssub.s32 %s15, 1
        // Predicated region
        $region13: #{tpu_custom_call.1} parent=11 // pred_check
          %p138 = pneg %p76
        $region14: #{tpu_custom_call.1} parent=11 // pred_check_branch
          %140 = sbr.rel (%p138) target = $region16
        $region15: #{tpu_custom_call.1} parent=11 // pred_region
          _
        $region16: #{tpu_custom_call.1} parent=11 // pred_fallthru
          _
        // Predicated region
        $region17: #{tpu_custom_call.1} parent=11 // pred_check
          %p141 = pneg %p97
        $region18: #{tpu_custom_call.1} parent=11 // pred_check_branch
          %143 = sbr.rel (%p141) target = $region20
        $region19: #{tpu_custom_call.1} parent=11 // pred_region
          _
        $region20: #{tpu_custom_call.1} parent=11 // pred_fallthru
          _
      $region12: #{tpu_custom_call.1} parent=5 // pred_fallthru
        _
      %p144 = scmp.lt.s32.totalorder %s15, 2
      // Predicated region
      $region21: #{tpu_custom_call.1} parent=5 // pred_check
        %p145 = pneg %p144
      $region22: #{tpu_custom_call.1} parent=5 // pred_check_branch
        %147 = sbr.rel (%p145) target = $region24
      $region23: #{tpu_custom_call.1} parent=5 // pred_region
        // Predicated region
        $region25: #{tpu_custom_call.1} parent=23 // pred_check
          %p148 = pneg %p49
        $region26: #{tpu_custom_call.1} parent=23 // pred_check_branch
          %150 = sbr.rel (%p148) target = $region28
        $region27: #{tpu_custom_call.1} parent=23 // pred_region
          %s151 = sand.u32 %s39, 1
          %s152 = scalar_lea.sflag [#allocation5], %s151
          %s153 = sand.u32 %s39, 1
          %s154 = smul.addr %s153, 64
          %s155 = scalar_lea.vmem [#allocation4], %s154
          %s156 = smul.u32 2, %s23
          %s158 = ssub.s32 1024, 1024
          %159 = vsyncadd %s152, %s158
          %s160 = smul.addr %s22, 8
          %s161 = sadd.s32 %s156, %s160
          %s162 = smul.addr %s161, 128
          %s163 = scalar_lea.hbm %s0, %s162
          %s164 = sshll.u32 %s155, 4
          %s165 = int_to_ptr.vmem [resolvable:$true] %s164
          %170 = dma.hbm_to_vmem [thread:$0]  %s163, 1024, %s165, %s152, 256, 256, 16
        $region28: #{tpu_custom_call.1} parent=23 // pred_fallthru
          _
      $region24: #{tpu_custom_call.1} parent=5 // pred_fallthru
        _
      %p171 = scmp.le.s32.totalorder 1, %s15
      %p172 = scmp.lt.s32.totalorder %s15, 3
      %p173 = pnand %p171, %p172
      %p174 = pneg %p173
      // Predicated region
      $region29: #{tpu_custom_call.1} parent=5 // pred_check
        _
      $region30: #{tpu_custom_call.1} parent=5 // pred_check_branch
        %176 = sbr.rel (%p173) target = $region32
      $region31: #{tpu_custom_call.1} parent=5 // pred_region
        %s177 = ssub.s32 %s15, 1
        %s178 = sand.u32 %s42, 1
        %s179 = scalar_lea.sflag [#allocation5], %s178
        %s180 = sand.u32 %s42, 1
        %s181 = smul.addr %s180, 64
        %s182 = scalar_lea.vmem [#allocation4], %s181
        // Predicated region
        $region33: #{tpu_custom_call.1} parent=31 // pred_check
          %p183 = pneg %p55
        $region34: #{tpu_custom_call.1} parent=31 // pred_check_branch
          %185 = sbr.rel (%p183) target = $region36
        $region35: #{tpu_custom_call.1} parent=31 // pred_region
          %186 = dma.done %s179, 1024
        $region36: #{tpu_custom_call.1} parent=31 // pred_fallthru
          _
        %s187 = sand.u32 %s42, 1
        %s188 = scalar_lea.sflag [#allocation5], %s187
        %s189 = sand.u32 %s42, 1
        %s190 = smul.addr %s189, 64
        %s191 = scalar_lea.vmem [#allocation4], %s190
        %p192 = pneg %p55
        %p193 = pneg %p52
        %p194 = pneg %p76
        %p195 = pneg %p73
        %p196 = pneg %p97
        %p197 = pneg %p94
        %p198 = pneg %p123
        %p199 = pneg %p120
        %s200 = sand.u32 %s110, 1
        %s201 = scalar_lea.sflag [#allocation6], %s200
        %s202 = sand.u32 %s110, 1
        %s203 = scalar_lea.vmem [#allocation7], %s202
        %s204 = smul.u32 2, %s25
        %v205 = vld [vmem:[%s182] sm:$0xff]
        %v206 = vld [vmem:[%s182 + $0x8] sm:$0xff]
        %v207 = vld [vmem:[%s182 + $0x10] sm:$0xff]
        %v208 = vld [vmem:[%s182 + $0x18] sm:$0xff]
        %v209 = vld [vmem:[%s182 + $0x20] sm:$0xff]
        %v210 = vld [vmem:[%s182 + $0x28] sm:$0xff]
        %v211 = vld [vmem:[%s182 + $0x30] sm:$0xff]
        %v212 = vld [vmem:[%s182 + $0x38] sm:$0xff]
        %v213 = vadd.f32 %v205, %v206
        %214 = vadd.xlane.f32.xlu0 %v213
        %v215 = vpop.xlane.xlu0 %214
        %v216 = vadd.f32 %v207, %v208
        %217 = vadd.xlane.f32.xlu0 %v216
        %v218 = vpop.xlane.xlu0 %217
        %v219 = vadd.f32 %v209, %v210
        %220 = vadd.xlane.f32.xlu0 %v219
        %v221 = vpop.xlane.xlu0 %220
        %v222 = vadd.f32 %v211, %v212
        %223 = vadd.xlane.f32.xlu0 %v222
        %v224 = vpop.xlane.xlu0 %223
        %v225 = vmax.f32 %v205, %v206
        %226 = vmax.xlane.f32.xlu0 %v225
        %v227 = vpop.xlane.xlu0 %226
        %v228 = vmax.f32 %v207, %v208
        %229 = vmax.xlane.f32.xlu0 %v228
        %v230 = vpop.xlane.xlu0 %229
        %v231 = vmax.f32 %v209, %v210
        %232 = vmax.xlane.f32.xlu0 %v231
        %v233 = vpop.xlane.xlu0 %232
        %v234 = vmax.f32 %v211, %v212
        %235 = vmax.xlane.f32.xlu0 %v234
        %v236 = vpop.xlane.xlu0 %235
        %p237 = scmp.eq.s32.totalorder %s25, 0
        // Predicated region
        $region37: #{tpu_custom_call.1} parent=31 // pred_check
          %p238 = pneg %p237
        $region38: #{tpu_custom_call.1} parent=31 // pred_check_branch
          %240 = sbr.rel (%p238) target = $region40
        $region39: #{tpu_custom_call.1} parent=31 // pred_region
          %v245 = vlaneseq
          %v246 = vand.u32 %v245, 127
          %v247 = vlaneseq
          %v248 = vshrl.u32 %v247, 7
          %v249 = vsub.s32 %v246, %v248
          %v250 = vrot.slane %v215, %v249
          %v251 = vadd.s32 %v246, 4294967288
          %v252 = vlaneseq
          %v253 = vshrl.u32 %v252, 7
          %v254 = vsub.s32 %v251, %v253
          %v255 = vrot.slane %v218, %v254
          %vm256 = vcmask 130112
          %v257 = vsel %vm256, %v255, %v250
          %v258 = vadd.s32 %v246, 4294967280
          %v259 = vlaneseq
          %v260 = vshrl.u32 %v259, 7
          %v261 = vsub.s32 %v258, %v260
          %v262 = vrot.slane %v221, %v261
          %vm263 = vcmask 195712
          %v264 = vsel %vm263, %v262, %v257
          %v265 = vadd.s32 %v246, 4294967272
          %v266 = vlaneseq
          %v267 = vshrl.u32 %v266, 7
          %v268 = vsub.s32 %v265, %v267
          %v269 = vrot.slane %v224, %v268
          %vm270 = vcmask 261312
          %v271 = vsel %vm270, %v269, %v264
          %vm273 = vcmask 253952
          %274 = vst.msk [vmem:[#allocation2] sm:$0x1] %vm273, %v271
          %v279 = vlaneseq
          %v280 = vshrl.u32 %v279, 7
          %v281 = vsub.s32 %v246, %v280
          %v282 = vrot.slane %v227, %v281
          %v283 = vlaneseq
          %v284 = vshrl.u32 %v283, 7
          %v285 = vsub.s32 %v251, %v284
          %v286 = vrot.slane %v230, %v285
          %v287 = vsel %vm256, %v286, %v282
          %v288 = vlaneseq
          %v289 = vshrl.u32 %v288, 7
          %v290 = vsub.s32 %v258, %v289
          %v291 = vrot.slane %v233, %v290
          %v292 = vsel %vm263, %v291, %v287
          %v293 = vlaneseq
          %v294 = vshrl.u32 %v293, 7
          %v295 = vsub.s32 %v265, %v294
          %v296 = vrot.slane %v236, %v295
          %v297 = vsel %vm270, %v296, %v292
          %299 = vst.msk [vmem:[#allocation3] sm:$0x1] %vm273, %v297
        $region40: #{tpu_custom_call.1} parent=31 // pred_fallthru
          _
        %p300 = scmp.gt.s32.totalorder %s25, 0
        // Predicated region
        $region41: #{tpu_custom_call.1} parent=31 // pred_check
          %p301 = pneg %p300
        $region42: #{tpu_custom_call.1} parent=31 // pred_check_branch
          %303 = sbr.rel (%p301) target = $region44
        $region43: #{tpu_custom_call.1} parent=31 // pred_region
          %v304 = vld [vmem:[#allocation2] sm:$0x1]
          %v309 = vlaneseq
          %v310 = vshrl.u32 %v309, 7
          %v311 = vsub.s32 0, %v310
          %v312 = vrot.slane %v215, %v311
          %v313 = vlaneseq
          %v314 = vshrl.u32 %v313, 7
          %v315 = vsub.s32 1, %v314
          %v316 = vrot.slane %v215, %v315
          %v317 = vlaneseq
          %v318 = vshrl.u32 %v317, 7
          %v319 = vsub.s32 2, %v318
          %v320 = vrot.slane %v215, %v319
          %v321 = vlaneseq
          %v322 = vshrl.u32 %v321, 7
          %v323 = vsub.s32 3, %v322
          %v324 = vrot.slane %v215, %v323
          %v325 = vlaneseq
          %v326 = vshrl.u32 %v325, 7
          %v327 = vsub.s32 4, %v326
          %v328 = vrot.slane %v215, %v327
          %v329 = vlaneseq
          %v330 = vshrl.u32 %v329, 7
          %v331 = vsub.s32 5, %v330
          %v332 = vrot.slane %v215, %v331
          %v333 = vlaneseq
          %v334 = vshrl.u32 %v333, 7
          %v335 = vsub.s32 6, %v334
          %v336 = vrot.slane %v215, %v335
          %v337 = vlaneseq
          %v338 = vshrl.u32 %v337, 7
          %v339 = vsub.s32 7, %v338
          %v340 = vrot.slane %v215, %v339
          %v341 = vlaneseq
          %v342 = vshrl.u32 %v341, 7
          %v343 = vsub.s32 0, %v342
          %v344 = vrot.slane %v218, %v343
          %v345 = vlaneseq
          %v346 = vshrl.u32 %v345, 7
          %v347 = vsub.s32 1, %v346
          %v348 = vrot.slane %v218, %v347
          %v349 = vlaneseq
          %v350 = vshrl.u32 %v349, 7
          %v351 = vsub.s32 2, %v350
          %v352 = vrot.slane %v218, %v351
          %v353 = vlaneseq
          %v354 = vshrl.u32 %v353, 7
          %v355 = vsub.s32 3, %v354
          %v356 = vrot.slane %v218, %v355
          %v357 = vlaneseq
          %v358 = vshrl.u32 %v357, 7
          %v359 = vsub.s32 4, %v358
          %v360 = vrot.slane %v218, %v359
          %v361 = vlaneseq
          %v362 = vshrl.u32 %v361, 7
          %v363 = vsub.s32 5, %v362
          %v364 = vrot.slane %v218, %v363
          %v365 = vlaneseq
          %v366 = vshrl.u32 %v365, 7
          %v367 = vsub.s32 6, %v366
          %v368 = vrot.slane %v218, %v367
          %v369 = vlaneseq
          %v370 = vshrl.u32 %v369, 7
          %v371 = vsub.s32 7, %v370
          %v372 = vrot.slane %v218, %v371
          %v373 = vlaneseq
          %v374 = vshrl.u32 %v373, 7
          %v375 = vsub.s32 0, %v374
          %v376 = vrot.slane %v221, %v375
          %v377 = vlaneseq
          %v378 = vshrl.u32 %v377, 7
          %v379 = vsub.s32 1, %v378
          %v380 = vrot.slane %v221, %v379
          %v381 = vlaneseq
          %v382 = vshrl.u32 %v381, 7
          %v383 = vsub.s32 2, %v382
          %v384 = vrot.slane %v221, %v383
          %v385 = vlaneseq
          %v386 = vshrl.u32 %v385, 7
          %v387 = vsub.s32 3, %v386
          %v388 = vrot.slane %v221, %v387
          %v389 = vlaneseq
          %v390 = vshrl.u32 %v389, 7
          %v391 = vsub.s32 4, %v390
          %v392 = vrot.slane %v221, %v391
          %v393 = vlaneseq
          %v394 = vshrl.u32 %v393, 7
          %v395 = vsub.s32 5, %v394
          %v396 = vrot.slane %v221, %v395
          %v397 = vlaneseq
          %v398 = vshrl.u32 %v397, 7
          %v399 = vsub.s32 6, %v398
          %v400 = vrot.slane %v221, %v399
          %v401 = vlaneseq
          %v402 = vshrl.u32 %v401, 7
          %v403 = vsub.s32 7, %v402
          %v404 = vrot.slane %v221, %v403
          %v405 = vlaneseq
          %v406 = vshrl.u32 %v405, 7
          %v407 = vsub.s32 0, %v406
          %v408 = vrot.slane %v224, %v407
          %v409 = vlaneseq
          %v410 = vshrl.u32 %v409, 7
          %v411 = vsub.s32 1, %v410
          %v412 = vrot.slane %v224, %v411
          %v413 = vlaneseq
          %v414 = vshrl.u32 %v413, 7
          %v415 = vsub.s32 2, %v414
          %v416 = vrot.slane %v224, %v415
          %v417 = vlaneseq
          %v418 = vshrl.u32 %v417, 7
          %v419 = vsub.s32 3, %v418
          %v420 = vrot.slane %v224, %v419
          %v421 = vlaneseq
          %v422 = vshrl.u32 %v421, 7
          %v423 = vsub.s32 4, %v422
          %v424 = vrot.slane %v224, %v423
          %v425 = vlaneseq
          %v426 = vshrl.u32 %v425, 7
          %v427 = vsub.s32 5, %v426
          %v428 = vrot.slane %v224, %v427
          %v429 = vlaneseq
          %v430 = vshrl.u32 %v429, 7
          %v431 = vsub.s32 6, %v430
          %v432 = vrot.slane %v224, %v431
          %v433 = vlaneseq
          %v434 = vshrl.u32 %v433, 7
          %v435 = vsub.s32 7, %v434
          %v436 = vrot.slane %v224, %v435
          %v437 = vcombine.low %v312, %v316
          %v438 = vcombine.low %v320, %v324
          %v439 = vcombine.low %v328, %v332
          %v440 = vcombine.low %v336, %v340
          %v442 = vunpack.c.l.s4 1966171168
          %v443 = vunpack.c.0.s8 %v442
          %v444 = vlaneseq
          %v445 = vshrl.u32 %v444, 7
          %v446 = vsub.s32 %v443, %v445
          %v447 = vrot.slane %v437, %v446
          %v449 = vunpack.c.l.s4 1966171168
          %v450 = vunpack.c.0.s8 %v449
          %v451 = vlaneseq
          %v452 = vshrl.u32 %v451, 7
          %v453 = vsub.s32 %v450, %v452
          %v454 = vrot.slane %v438, %v453
          %v456 = vunpack.c.l.s4 1966171168
          %v457 = vunpack.c.0.s8 %v456
          %v458 = vlaneseq
          %v459 = vshrl.u32 %v458, 7
          %v460 = vsub.s32 %v457, %v459
          %v461 = vrot.slane %v439, %v460
          %v463 = vunpack.c.l.s4 1966171168
          %v464 = vunpack.c.0.s8 %v463
          %v465 = vlaneseq
          %v466 = vshrl.u32 %v465, 7
          %v467 = vsub.s32 %v464, %v466
          %v468 = vrot.slane %v440, %v467
          %v469 = vcombine.low %v447, %v454
          %v470 = vcombine.low %v461, %v468
          %v472 = vunpack.c.l.s4 1966171168
          %v473 = vunpack.c.0.s8 %v472
          %v474 = vlaneseq
          %v475 = vshrl.u32 %v474, 7
          %v476 = vsub.s32 %v473, %v475
          %v477 = vrot.slane %v469, %v476
          %v479 = vunpack.c.l.s4 1966171168
          %v480 = vunpack.c.0.s8 %v479
          %v481 = vlaneseq
          %v482 = vshrl.u32 %v481, 7
          %v483 = vsub.s32 %v480, %v482
          %v484 = vrot.slane %v470, %v483
          %v485 = vcombine.low %v477, %v484
          %v486 = vcombine.low %v344, %v348
          %v487 = vcombine.low %v352, %v356
          %v488 = vcombine.low %v360, %v364
          %v489 = vcombine.low %v368, %v372
          %v491 = vunpack.c.l.s4 1966171168
          %v492 = vunpack.c.0.s8 %v491
          %v493 = vlaneseq
          %v494 = vshrl.u32 %v493, 7
          %v495 = vsub.s32 %v492, %v494
          %v496 = vrot.slane %v486, %v495
          %v498 = vunpack.c.l.s4 1966171168
          %v499 = vunpack.c.0.s8 %v498
          %v500 = vlaneseq
          %v501 = vshrl.u32 %v500, 7
          %v502 = vsub.s32 %v499, %v501
          %v503 = vrot.slane %v487, %v502
          %v505 = vunpack.c.l.s4 1966171168
          %v506 = vunpack.c.0.s8 %v505
          %v507 = vlaneseq
          %v508 = vshrl.u32 %v507, 7
          %v509 = vsub.s32 %v506, %v508
          %v510 = vrot.slane %v488, %v509
          %v512 = vunpack.c.l.s4 1966171168
          %v513 = vunpack.c.0.s8 %v512
          %v514 = vlaneseq
          %v515 = vshrl.u32 %v514, 7
          %v516 = vsub.s32 %v513, %v515
          %v517 = vrot.slane %v489, %v516
          %v518 = vcombine.low %v496, %v503
          %v519 = vcombine.low %v510, %v517
          %v521 = vunpack.c.l.s4 1966171168
          %v522 = vunpack.c.0.s8 %v521
          %v523 = vlaneseq
          %v524 = vshrl.u32 %v523, 7
          %v525 = vsub.s32 %v522, %v524
          %v526 = vrot.slane %v518, %v525
          %v528 = vunpack.c.l.s4 1966171168
          %v529 = vunpack.c.0.s8 %v528
          %v530 = vlaneseq
          %v531 = vshrl.u32 %v530, 7
          %v532 = vsub.s32 %v529, %v531
          %v533 = vrot.slane %v519, %v532
          %v534 = vcombine.low %v526, %v533
          %v535 = vcombine.low %v376, %v380
          %v536 = vcombine.low %v384, %v388
          %v537 = vcombine.low %v392, %v396
          %v538 = vcombine.low %v400, %v404
          %v540 = vunpack.c.l.s4 1966171168
          %v541 = vunpack.c.0.s8 %v540
          %v542 = vlaneseq
          %v543 = vshrl.u32 %v542, 7
          %v544 = vsub.s32 %v541, %v543
          %v545 = vrot.slane %v535, %v544
          %v547 = vunpack.c.l.s4 1966171168
          %v548 = vunpack.c.0.s8 %v547
          %v549 = vlaneseq
          %v550 = vshrl.u32 %v549, 7
          %v551 = vsub.s32 %v548, %v550
          %v552 = vrot.slane %v536, %v551
          %v554 = vunpack.c.l.s4 1966171168
          %v555 = vunpack.c.0.s8 %v554
          %v556 = vlaneseq
          %v557 = vshrl.u32 %v556, 7
          %v558 = vsub.s32 %v555, %v557
          %v559 = vrot.slane %v537, %v558
          %v561 = vunpack.c.l.s4 1966171168
          %v562 = vunpack.c.0.s8 %v561
          %v563 = vlaneseq
          %v564 = vshrl.u32 %v563, 7
          %v565 = vsub.s32 %v562, %v564
          %v566 = vrot.slane %v538, %v565
          %v567 = vcombine.low %v545, %v552
          %v568 = vcombine.low %v559, %v566
          %v570 = vunpack.c.l.s4 1966171168
          %v571 = vunpack.c.0.s8 %v570
          %v572 = vlaneseq
          %v573 = vshrl.u32 %v572, 7
          %v574 = vsub.s32 %v571, %v573
          %v575 = vrot.slane %v567, %v574
          %v577 = vunpack.c.l.s4 1966171168
          %v578 = vunpack.c.0.s8 %v577
          %v579 = vlaneseq
          %v580 = vshrl.u32 %v579, 7
          %v581 = vsub.s32 %v578, %v580
          %v582 = vrot.slane %v568, %v581
          %v583 = vcombine.low %v575, %v582
          %v584 = vcombine.low %v408, %v412
          %v585 = vcombine.low %v416, %v420
          %v586 = vcombine.low %v424, %v428
          %v587 = vcombine.low %v432, %v436
          %v589 = vunpack.c.l.s4 1966171168
          %v590 = vunpack.c.0.s8 %v589
          %v591 = vlaneseq
          %v592 = vshrl.u32 %v591, 7
          %v593 = vsub.s32 %v590, %v592
          %v594 = vrot.slane %v584, %v593
          %v596 = vunpack.c.l.s4 1966171168
          %v597 = vunpack.c.0.s8 %v596
          %v598 = vlaneseq
          %v599 = vshrl.u32 %v598, 7
          %v600 = vsub.s32 %v597, %v599
          %v601 = vrot.slane %v585, %v600
          %v603 = vunpack.c.l.s4 1966171168
          %v604 = vunpack.c.0.s8 %v603
          %v605 = vlaneseq
          %v606 = vshrl.u32 %v605, 7
          %v607 = vsub.s32 %v604, %v606
          %v608 = vrot.slane %v586, %v607
          %v610 = vunpack.c.l.s4 1966171168
          %v611 = vunpack.c.0.s8 %v610
          %v612 = vlaneseq
          %v613 = vshrl.u32 %v612, 7
          %v614 = vsub.s32 %v611, %v613
          %v615 = vrot.slane %v587, %v614
          %v616 = vcombine.low %v594, %v601
          %v617 = vcombine.low %v608, %v615
          %v619 = vunpack.c.l.s4 1966171168
          %v620 = vunpack.c.0.s8 %v619
          %v621 = vlaneseq
          %v622 = vshrl.u32 %v621, 7
          %v623 = vsub.s32 %v620, %v622
          %v624 = vrot.slane %v616, %v623
          %v626 = vunpack.c.l.s4 1966171168
          %v627 = vunpack.c.0.s8 %v626
          %v628 = vlaneseq
          %v629 = vshrl.u32 %v628, 7
          %v630 = vsub.s32 %v627, %v629
          %v631 = vrot.slane %v617, %v630
          %v632 = vcombine.low %v624, %v631
          %633 = vset.pattern.permute.xlu0 0
          %634 = vperm.xlu0 %633, %v485
          %v635 = vpop.permute.xlu0 %634
          %636 = vset.pattern.permute.xlu0 0
          %637 = vperm.xlu0 %636, %v534
          %v638 = vpop.permute.xlu0 %637
          %639 = vset.pattern.permute.xlu0 0
          %640 = vperm.xlu0 %639, %v583
          %v641 = vpop.permute.xlu0 %640
          %642 = vset.pattern.permute.xlu0 0
          %643 = vperm.xlu0 %642, %v632
          %v644 = vpop.permute.xlu0 %643
          %v645 = vlaneseq
          %v646 = vand.u32 %v645, 127
          %v647 = vlaneseq
          %v648 = vshrl.u32 %v647, 7
          %v649 = vsub.s32 %v646, %v648
          %v650 = vrot.slane %v635, %v649
          %v651 = vadd.s32 %v646, 4294967288
          %v652 = vlaneseq
          %v653 = vshrl.u32 %v652, 7
          %v654 = vsub.s32 %v651, %v653
          %v655 = vrot.slane %v638, %v654
          %vm656 = vcmask 130112
          %v657 = vsel %vm656, %v655, %v650
          %v658 = vadd.s32 %v646, 4294967280
          %v659 = vlaneseq
          %v660 = vshrl.u32 %v659, 7
          %v661 = vsub.s32 %v658, %v660
          %v662 = vrot.slane %v641, %v661
          %vm663 = vcmask 195712
          %v664 = vsel %vm663, %v662, %v657
          %v665 = vadd.s32 %v646, 4294967272
          %v666 = vlaneseq
          %v667 = vshrl.u32 %v666, 7
          %v668 = vsub.s32 %v665, %v667
          %v669 = vrot.slane %v644, %v668
          %vm670 = vcmask 261312
          %v671 = vsel %vm670, %v669, %v664
          %v673 = vunpack.c.l.s4 1966171168
          %v674 = vunpack.c.0.s8 %v673
          %v675 = vlaneseq
          %v676 = vshrl.u32 %v675, 7
          %v677 = vsub.s32 %v674, %v676
          %v678 = vrot.slane %v671, %v677
          %v680 = vunpack.c.l.s4 1966171168
          %v681 = vunpack.c.0.s8 %v680
          %v682 = vlaneseq
          %v683 = vshrl.u32 %v682, 7
          %v684 = vsub.s32 %v681, %v683
          %v685 = vrot.slane %v678, %v684
          %v687 = vadd.f32 %v304, %v685
          %vm688 = vcmask 253952
          %689 = vst.msk [vmem:[#allocation2] sm:$0x1] %vm688, %v687
          %v690 = vld [vmem:[#allocation3] sm:$0x1]
          %v695 = vlaneseq
          %v696 = vshrl.u32 %v695, 7
          %v697 = vsub.s32 0, %v696
          %v698 = vrot.slane %v227, %v697
          %v699 = vlaneseq
          %v700 = vshrl.u32 %v699, 7
          %v701 = vsub.s32 1, %v700
          %v702 = vrot.slane %v227, %v701
          %v703 = vlaneseq
          %v704 = vshrl.u32 %v703, 7
          %v705 = vsub.s32 2, %v704
          %v706 = vrot.slane %v227, %v705
          %v707 = vlaneseq
          %v708 = vshrl.u32 %v707, 7
          %v709 = vsub.s32 3, %v708
          %v710 = vrot.slane %v227, %v709
          %v711 = vlaneseq
          %v712 = vshrl.u32 %v711, 7
          %v713 = vsub.s32 4, %v712
          %v714 = vrot.slane %v227, %v713
          %v715 = vlaneseq
          %v716 = vshrl.u32 %v715, 7
          %v717 = vsub.s32 5, %v716
          %v718 = vrot.slane %v227, %v717
          %v719 = vlaneseq
          %v720 = vshrl.u32 %v719, 7
          %v721 = vsub.s32 6, %v720
          %v722 = vrot.slane %v227, %v721
          %v723 = vlaneseq
          %v724 = vshrl.u32 %v723, 7
          %v725 = vsub.s32 7, %v724
          %v726 = vrot.slane %v227, %v725
          %v727 = vlaneseq
          %v728 = vshrl.u32 %v727, 7
          %v729 = vsub.s32 0, %v728
          %v730 = vrot.slane %v230, %v729
          %v731 = vlaneseq
          %v732 = vshrl.u32 %v731, 7
          %v733 = vsub.s32 1, %v732
          %v734 = vrot.slane %v230, %v733
          %v735 = vlaneseq
          %v736 = vshrl.u32 %v735, 7
          %v737 = vsub.s32 2, %v736
          %v738 = vrot.slane %v230, %v737
          %v739 = vlaneseq
          %v740 = vshrl.u32 %v739, 7
          %v741 = vsub.s32 3, %v740
          %v742 = vrot.slane %v230, %v741
          %v743 = vlaneseq
          %v744 = vshrl.u32 %v743, 7
          %v745 = vsub.s32 4, %v744
          %v746 = vrot.slane %v230, %v745
          %v747 = vlaneseq
          %v748 = vshrl.u32 %v747, 7
          %v749 = vsub.s32 5, %v748
          %v750 = vrot.slane %v230, %v749
          %v751 = vlaneseq
          %v752 = vshrl.u32 %v751, 7
          %v753 = vsub.s32 6, %v752
          %v754 = vrot.slane %v230, %v753
          %v755 = vlaneseq
          %v756 = vshrl.u32 %v755, 7
          %v757 = vsub.s32 7, %v756
          %v758 = vrot.slane %v230, %v757
          %v759 = vlaneseq
          %v760 = vshrl.u32 %v759, 7
          %v761 = vsub.s32 0, %v760
          %v762 = vrot.slane %v233, %v761
          %v763 = vlaneseq
          %v764 = vshrl.u32 %v763, 7
          %v765 = vsub.s32 1, %v764
          %v766 = vrot.slane %v233, %v765
          %v767 = vlaneseq
          %v768 = vshrl.u32 %v767, 7
          %v769 = vsub.s32 2, %v768
          %v770 = vrot.slane %v233, %v769
          %v771 = vlaneseq
          %v772 = vshrl.u32 %v771, 7
          %v773 = vsub.s32 3, %v772
          %v774 = vrot.slane %v233, %v773
          %v775 = vlaneseq
          %v776 = vshrl.u32 %v775, 7
          %v777 = vsub.s32 4, %v776
          %v778 = vrot.slane %v233, %v777
          %v779 = vlaneseq
          %v780 = vshrl.u32 %v779, 7
          %v781 = vsub.s32 5, %v780
          %v782 = vrot.slane %v233, %v781
          %v783 = vlaneseq
          %v784 = vshrl.u32 %v783, 7
          %v785 = vsub.s32 6, %v784
          %v786 = vrot.slane %v233, %v785
          %v787 = vlaneseq
          %v788 = vshrl.u32 %v787, 7
          %v789 = vsub.s32 7, %v788
          %v790 = vrot.slane %v233, %v789
          %v791 = vlaneseq
          %v792 = vshrl.u32 %v791, 7
          %v793 = vsub.s32 0, %v792
          %v794 = vrot.slane %v236, %v793
          %v795 = vlaneseq
          %v796 = vshrl.u32 %v795, 7
          %v797 = vsub.s32 1, %v796
          %v798 = vrot.slane %v236, %v797
          %v799 = vlaneseq
          %v800 = vshrl.u32 %v799, 7
          %v801 = vsub.s32 2, %v800
          %v802 = vrot.slane %v236, %v801
          %v803 = vlaneseq
          %v804 = vshrl.u32 %v803, 7
          %v805 = vsub.s32 3, %v804
          %v806 = vrot.slane %v236, %v805
          %v807 = vlaneseq
          %v808 = vshrl.u32 %v807, 7
          %v809 = vsub.s32 4, %v808
          %v810 = vrot.slane %v236, %v809
          %v811 = vlaneseq
          %v812 = vshrl.u32 %v811, 7
          %v813 = vsub.s32 5, %v812
          %v814 = vrot.slane %v236, %v813
          %v815 = vlaneseq
          %v816 = vshrl.u32 %v815, 7
          %v817 = vsub.s32 6, %v816
          %v818 = vrot.slane %v236, %v817
          %v819 = vlaneseq
          %v820 = vshrl.u32 %v819, 7
          %v821 = vsub.s32 7, %v820
          %v822 = vrot.slane %v236, %v821
          %v823 = vcombine.low %v698, %v702
          %v824 = vcombine.low %v706, %v710
          %v825 = vcombine.low %v714, %v718
          %v826 = vcombine.low %v722, %v726
          %v828 = vunpack.c.l.s4 1966171168
          %v829 = vunpack.c.0.s8 %v828
          %v830 = vlaneseq
          %v831 = vshrl.u32 %v830, 7
          %v832 = vsub.s32 %v829, %v831
          %v833 = vrot.slane %v823, %v832
          %v835 = vunpack.c.l.s4 1966171168
          %v836 = vunpack.c.0.s8 %v835
          %v837 = vlaneseq
          %v838 = vshrl.u32 %v837, 7
          %v839 = vsub.s32 %v836, %v838
          %v840 = vrot.slane %v824, %v839
          %v842 = vunpack.c.l.s4 1966171168
          %v843 = vunpack.c.0.s8 %v842
          %v844 = vlaneseq
          %v845 = vshrl.u32 %v844, 7
          %v846 = vsub.s32 %v843, %v845
          %v847 = vrot.slane %v825, %v846
          %v849 = vunpack.c.l.s4 1966171168
          %v850 = vunpack.c.0.s8 %v849
          %v851 = vlaneseq
          %v852 = vshrl.u32 %v851, 7
          %v853 = vsub.s32 %v850, %v852
          %v854 = vrot.slane %v826, %v853
          %v855 = vcombine.low %v833, %v840
          %v856 = vcombine.low %v847, %v854
          %v858 = vunpack.c.l.s4 1966171168
          %v859 = vunpack.c.0.s8 %v858
          %v860 = vlaneseq
          %v861 = vshrl.u32 %v860, 7
          %v862 = vsub.s32 %v859, %v861
          %v863 = vrot.slane %v855, %v862
          %v865 = vunpack.c.l.s4 1966171168
          %v866 = vunpack.c.0.s8 %v865
          %v867 = vlaneseq
          %v868 = vshrl.u32 %v867, 7
          %v869 = vsub.s32 %v866, %v868
          %v870 = vrot.slane %v856, %v869
          %v871 = vcombine.low %v863, %v870
          %v872 = vcombine.low %v730, %v734
          %v873 = vcombine.low %v738, %v742
          %v874 = vcombine.low %v746, %v750
          %v875 = vcombine.low %v754, %v758
          %v877 = vunpack.c.l.s4 1966171168
          %v878 = vunpack.c.0.s8 %v877
          %v879 = vlaneseq
          %v880 = vshrl.u32 %v879, 7
          %v881 = vsub.s32 %v878, %v880
          %v882 = vrot.slane %v872, %v881
          %v884 = vunpack.c.l.s4 1966171168
          %v885 = vunpack.c.0.s8 %v884
          %v886 = vlaneseq
          %v887 = vshrl.u32 %v886, 7
          %v888 = vsub.s32 %v885, %v887
          %v889 = vrot.slane %v873, %v888
          %v891 = vunpack.c.l.s4 1966171168
          %v892 = vunpack.c.0.s8 %v891
          %v893 = vlaneseq
          %v894 = vshrl.u32 %v893, 7
          %v895 = vsub.s32 %v892, %v894
          %v896 = vrot.slane %v874, %v895
          %v898 = vunpack.c.l.s4 1966171168
          %v899 = vunpack.c.0.s8 %v898
          %v900 = vlaneseq
          %v901 = vshrl.u32 %v900, 7
          %v902 = vsub.s32 %v899, %v901
          %v903 = vrot.slane %v875, %v902
          %v904 = vcombine.low %v882, %v889
          %v905 = vcombine.low %v896, %v903
          %v907 = vunpack.c.l.s4 1966171168
          %v908 = vunpack.c.0.s8 %v907
          %v909 = vlaneseq
          %v910 = vshrl.u32 %v909, 7
          %v911 = vsub.s32 %v908, %v910
          %v912 = vrot.slane %v904, %v911
          %v914 = vunpack.c.l.s4 1966171168
          %v915 = vunpack.c.0.s8 %v914
          %v916 = vlaneseq
          %v917 = vshrl.u32 %v916, 7
          %v918 = vsub.s32 %v915, %v917
          %v919 = vrot.slane %v905, %v918
          %v920 = vcombine.low %v912, %v919
          %v921 = vcombine.low %v762, %v766
          %v922 = vcombine.low %v770, %v774
          %v923 = vcombine.low %v778, %v782
          %v924 = vcombine.low %v786, %v790
          %v926 = vunpack.c.l.s4 1966171168
          %v927 = vunpack.c.0.s8 %v926
          %v928 = vlaneseq
          %v929 = vshrl.u32 %v928, 7
          %v930 = vsub.s32 %v927, %v929
          %v931 = vrot.slane %v921, %v930
          %v933 = vunpack.c.l.s4 1966171168
          %v934 = vunpack.c.0.s8 %v933
          %v935 = vlaneseq
          %v936 = vshrl.u32 %v935, 7
          %v937 = vsub.s32 %v934, %v936
          %v938 = vrot.slane %v922, %v937
          %v940 = vunpack.c.l.s4 1966171168
          %v941 = vunpack.c.0.s8 %v940
          %v942 = vlaneseq
          %v943 = vshrl.u32 %v942, 7
          %v944 = vsub.s32 %v941, %v943
          %v945 = vrot.slane %v923, %v944
          %v947 = vunpack.c.l.s4 1966171168
          %v948 = vunpack.c.0.s8 %v947
          %v949 = vlaneseq
          %v950 = vshrl.u32 %v949, 7
          %v951 = vsub.s32 %v948, %v950
          %v952 = vrot.slane %v924, %v951
          %v953 = vcombine.low %v931, %v938
          %v954 = vcombine.low %v945, %v952
          %v956 = vunpack.c.l.s4 1966171168
          %v957 = vunpack.c.0.s8 %v956
          %v958 = vlaneseq
          %v959 = vshrl.u32 %v958, 7
          %v960 = vsub.s32 %v957, %v959
          %v961 = vrot.slane %v953, %v960
          %v963 = vunpack.c.l.s4 1966171168
          %v964 = vunpack.c.0.s8 %v963
          %v965 = vlaneseq
          %v966 = vshrl.u32 %v965, 7
          %v967 = vsub.s32 %v964, %v966
          %v968 = vrot.slane %v954, %v967
          %v969 = vcombine.low %v961, %v968
          %v970 = vcombine.low %v794, %v798
          %v971 = vcombine.low %v802, %v806
          %v972 = vcombine.low %v810, %v814
          %v973 = vcombine.low %v818, %v822
          %v975 = vunpack.c.l.s4 1966171168
          %v976 = vunpack.c.0.s8 %v975
          %v977 = vlaneseq
          %v978 = vshrl.u32 %v977, 7
          %v979 = vsub.s32 %v976, %v978
          %v980 = vrot.slane %v970, %v979
          %v982 = vunpack.c.l.s4 1966171168
          %v983 = vunpack.c.0.s8 %v982
          %v984 = vlaneseq
          %v985 = vshrl.u32 %v984, 7
          %v986 = vsub.s32 %v983, %v985
          %v987 = vrot.slane %v971, %v986
          %v989 = vunpack.c.l.s4 1966171168
          %v990 = vunpack.c.0.s8 %v989
          %v991 = vlaneseq
          %v992 = vshrl.u32 %v991, 7
          %v993 = vsub.s32 %v990, %v992
          %v994 = vrot.slane %v972, %v993
          %v996 = vunpack.c.l.s4 1966171168
          %v997 = vunpack.c.0.s8 %v996
          %v998 = vlaneseq
          %v999 = vshrl.u32 %v998, 7
          %v1000 = vsub.s32 %v997, %v999
          %v1001 = vrot.slane %v973, %v1000
          %v1002 = vcombine.low %v980, %v987
          %v1003 = vcombine.low %v994, %v1001
          %v1005 = vunpack.c.l.s4 1966171168
          %v1006 = vunpack.c.0.s8 %v1005
          %v1007 = vlaneseq
          %v1008 = vshrl.u32 %v1007, 7
          %v1009 = vsub.s32 %v1006, %v1008
          %v1010 = vrot.slane %v1002, %v1009
          %v1012 = vunpack.c.l.s4 1966171168
          %v1013 = vunpack.c.0.s8 %v1012
          %v1014 = vlaneseq
          %v1015 = vshrl.u32 %v1014, 7
          %v1016 = vsub.s32 %v1013, %v1015
          %v1017 = vrot.slane %v1003, %v1016
          %v1018 = vcombine.low %v1010, %v1017
          %1019 = vset.pattern.permute.xlu0 0
          %1020 = vperm.xlu0 %1019, %v871
          %v1021 = vpop.permute.xlu0 %1020
          %1022 = vset.pattern.permute.xlu0 0
          %1023 = vperm.xlu0 %1022, %v920
          %v1024 = vpop.permute.xlu0 %1023
          %1025 = vset.pattern.permute.xlu0 0
          %1026 = vperm.xlu0 %1025, %v969
          %v1027 = vpop.permute.xlu0 %1026
          %1028 = vset.pattern.permute.xlu0 0
          %1029 = vperm.xlu0 %1028, %v1018
          %v1030 = vpop.permute.xlu0 %1029
          %v1031 = vlaneseq
          %v1032 = vshrl.u32 %v1031, 7
          %v1033 = vsub.s32 %v646, %v1032
          %v1034 = vrot.slane %v1021, %v1033
          %v1035 = vlaneseq
          %v1036 = vshrl.u32 %v1035, 7
          %v1037 = vsub.s32 %v651, %v1036
          %v1038 = vrot.slane %v1024, %v1037
          %v1039 = vsel %vm656, %v1038, %v1034
          %v1040 = vlaneseq
          %v1041 = vshrl.u32 %v1040, 7
          %v1042 = vsub.s32 %v658, %v1041
          %v1043 = vrot.slane %v1027, %v1042
          %v1044 = vsel %vm663, %v1043, %v1039
          %v1045 = vlaneseq
          %v1046 = vshrl.u32 %v1045, 7
          %v1047 = vsub.s32 %v665, %v1046
          %v1048 = vrot.slane %v1030, %v1047
          %v1049 = vsel %vm670, %v1048, %v1044
          %v1051 = vunpack.c.l.s4 1966171168
          %v1052 = vunpack.c.0.s8 %v1051
          %v1053 = vlaneseq
          %v1054 = vshrl.u32 %v1053, 7
          %v1055 = vsub.s32 %v1052, %v1054
          %v1056 = vrot.slane %v1049, %v1055
          %v1058 = vunpack.c.l.s4 1966171168
          %v1059 = vunpack.c.0.s8 %v1058
          %v1060 = vlaneseq
          %v1061 = vshrl.u32 %v1060, 7
          %v1062 = vsub.s32 %v1059, %v1061
          %v1063 = vrot.slane %v1056, %v1062
          %v1065 = vmax.f32 %v690, %v1063
          %1066 = vst.msk [vmem:[#allocation3] sm:$0x1] %vm688, %v1065
        $region44: #{tpu_custom_call.1} parent=31 // pred_fallthru
          _
        // Predicated region
        $region45: #{tpu_custom_call.1} parent=31 // pred_check
          %p1067 = pneg %p237
        $region46: #{tpu_custom_call.1} parent=31 // pred_check_branch
          %1069 = sbr.rel (%p1067) target = $region48
        $region47: #{tpu_custom_call.1} parent=31 // pred_region
          %v1070 = vld [vmem:[#allocation2] sm:$0x1]
          %v1071 = vmul.f32 %v1070, 0.00390625
          %v1072 = vld [vmem:[#allocation3] sm:$0x1]
          %v1073 = vld [vmem:[%s1] sm:$0xff]
          %v1074 = vld [vmem:[%s1 + $0x8] sm:$0xff]
          %v1075 = vld [vmem:[%s1 + $0x10] sm:$0xff]
          %v1076 = vld [vmem:[%s1 + $0x18] sm:$0xff]
          %vm1077 = vcmask 261120
          %v1079 = vsel %vm1077, %v1071, 0
          %1081 = vmatprep.subr.mxu0 0.0
          %1082 = vmatpush1.msra.mxu0 0.0
          %1083 = vmatprep.subr.mxu0 0.0
          %1084 = vmatpush1.msra.mxu0 0.0
          %1085 = vmatprep.subr.mxu0 0.0
          %1086 = vmatpush1.msra.mxu0 0.0
          %1087 = vmatprep.subr.mxu0 0.0
          %1088 = vmatpush1.msra.mxu0 0.0
          %1089 = vmatprep.subr.mxu0 0.0
          %1090 = vmatpush1.msra.mxu0 0.0
          %1091 = vmatprep.subr.mxu0 0.0
          %1092 = vmatpush1.msra.mxu0 0.0
          %1093 = vmatprep.subr.mxu0 0.0
          %1094 = vmatpush1.msra.mxu0 0.0
          %1095 = vmatprep.subr.mxu0 0.0
          %1096 = vmatpush1.msra.mxu0 0.0
          %1097 = vmatprep.subr.mxu0 0.0
          %1098 = vmatpush1.msra.mxu0 0.0
          %1099 = vmatprep.subr.mxu0 0.0
          %1100 = vmatpush1.msra.mxu0 0.0
          %1101 = vmatprep.subr.mxu0 0.0
          %1102 = vmatpush1.msra.mxu0 0.0
          %1103 = vmatprep.subr.mxu0 0.0
          %1104 = vmatpush1.msra.mxu0 0.0
          %1105 = vmatprep.subr.mxu0 0.0
          %1106 = vmatpush1.msra.mxu0 %v1076
          %1107 = vmatprep.subr.mxu0 0.0
          %1108 = vmatpush1.msra.mxu0 %v1075
          %1109 = vmatprep.subr.mxu0 0.0
          %1110 = vmatpush1.msra.mxu0 %v1074
          %1111 = vmatprep.subr.mxu0 0.0
          %1112 = vmatpush1.msra.mxu0 %v1073
          %1113 = vmatprep.subr.mxu0 0.0
          %1114 = vmatpush2.msra.mxu0 0.0
          %1115 = vmatprep.subr.mxu0 0.0
          %1116 = vmatpush2.msra.mxu0 0.0
          %1117 = vmatprep.subr.mxu0 0.0
          %1118 = vmatpush2.msra.mxu0 0.0
          %1119 = vmatprep.subr.mxu0 0.0
          %1120 = vmatpush2.msra.mxu0 0.0
          %1121 = vmatprep.subr.mxu0 0.0
          %1122 = vmatpush2.msra.mxu0 0.0
          %1123 = vmatprep.subr.mxu0 0.0
          %1124 = vmatpush2.msra.mxu0 0.0
          %1125 = vmatprep.subr.mxu0 0.0
          %1126 = vmatpush2.msra.mxu0 0.0
          %1127 = vmatprep.subr.mxu0 0.0
          %1128 = vmatpush2.msra.mxu0 0.0
          %1129 = vmatprep.subr.mxu0 0.0
          %1130 = vmatpush2.msra.mxu0 0.0
          %1131 = vmatprep.subr.mxu0 0.0
          %1132 = vmatpush2.msra.mxu0 0.0
          %1133 = vmatprep.subr.mxu0 0.0
          %1134 = vmatpush2.msra.mxu0 0.0
          %1135 = vmatprep.subr.mxu0 0.0
          %1136 = vmatpush2.msra.mxu0 0.0
          %1137 = vmatprep.subr.mxu0 0.0
          %1138 = vmatpush2.msra.mxu0 0.0
          %1139 = vmatprep.subr.mxu0 0.0
          %1140 = vmatpush2.msra.mxu0 0.0
          %1141 = vmatprep.subr.mxu0 0.0
          %1142 = vmatpush2.msra.mxu0 0.0
          %1143 = vmatprep.subr.mxu0 0.0
          %1144 = vmatpush2.msra.mxu0 0.0
          %1145 = vmatprep.mubr.f32.mxu0 0.0
          %1146 = vmatmul.mubr.f32.gmra.mxu0 %v1079
          %v1147 = vpop.f32.mrf.mxu0
          %v1148 = vadd.f32 0.0, %v1147
          %v1149 = vpop.f32.mrf.mxu0
          %1150 = vdwg.mxu0
          %v1151 = vmax.f32 %v1148, 0.0
          %v1153 = vsel %vm1077, %v1072, 0
          %1155 = vmatprep.subr.mxu0 0.0
          %1156 = vmatpush1.msra.mxu0 0.0
          %1157 = vmatprep.subr.mxu0 0.0
          %1158 = vmatpush1.msra.mxu0 0.0
          %1159 = vmatprep.subr.mxu0 0.0
          %1160 = vmatpush1.msra.mxu0 0.0
          %1161 = vmatprep.subr.mxu0 0.0
          %1162 = vmatpush1.msra.mxu0 0.0
          %1163 = vmatprep.subr.mxu0 0.0
          %1164 = vmatpush1.msra.mxu0 0.0
          %1165 = vmatprep.subr.mxu0 0.0
          %1166 = vmatpush1.msra.mxu0 0.0
          %1167 = vmatprep.subr.mxu0 0.0
          %1168 = vmatpush1.msra.mxu0 0.0
          %1169 = vmatprep.subr.mxu0 0.0
          %1170 = vmatpush1.msra.mxu0 0.0
          %1171 = vmatprep.subr.mxu0 0.0
          %1172 = vmatpush1.msra.mxu0 0.0
          %1173 = vmatprep.subr.mxu0 0.0
          %1174 = vmatpush1.msra.mxu0 0.0
          %1175 = vmatprep.subr.mxu0 0.0
          %1176 = vmatpush1.msra.mxu0 0.0
          %1177 = vmatprep.subr.mxu0 0.0
          %1178 = vmatpush1.msra.mxu0 0.0
          %1179 = vmatprep.subr.mxu0 0.0
          %1180 = vmatpush1.msra.mxu0 %v1076
          %1181 = vmatprep.subr.mxu0 0.0
          %1182 = vmatpush1.msra.mxu0 %v1075
          %1183 = vmatprep.subr.mxu0 0.0
          %1184 = vmatpush1.msra.mxu0 %v1074
          %1185 = vmatprep.subr.mxu0 0.0
          %1186 = vmatpush1.msra.mxu0 %v1073
          %1187 = vmatprep.subr.mxu0 0.0
          %1188 = vmatpush2.msra.mxu0 0.0
          %1189 = vmatprep.subr.mxu0 0.0
          %1190 = vmatpush2.msra.mxu0 0.0
          %1191 = vmatprep.subr.mxu0 0.0
          %1192 = vmatpush2.msra.mxu0 0.0
          %1193 = vmatprep.subr.mxu0 0.0
          %1194 = vmatpush2.msra.mxu0 0.0
          %1195 = vmatprep.subr.mxu0 0.0
          %1196 = vmatpush2.msra.mxu0 0.0
          %1197 = vmatprep.subr.mxu0 0.0
          %1198 = vmatpush2.msra.mxu0 0.0
          %1199 = vmatprep.subr.mxu0 0.0
          %1200 = vmatpush2.msra.mxu0 0.0
          %1201 = vmatprep.subr.mxu0 0.0
          %1202 = vmatpush2.msra.mxu0 0.0
          %1203 = vmatprep.subr.mxu0 0.0
          %1204 = vmatpush2.msra.mxu0 0.0
          %1205 = vmatprep.subr.mxu0 0.0
          %1206 = vmatpush2.msra.mxu0 0.0
          %1207 = vmatprep.subr.mxu0 0.0
          %1208 = vmatpush2.msra.mxu0 0.0
          %1209 = vmatprep.subr.mxu0 0.0
          %1210 = vmatpush2.msra.mxu0 0.0
          %1211 = vmatprep.subr.mxu0 0.0
          %1212 = vmatpush2.msra.mxu0 0.0
          %1213 = vmatprep.subr.mxu0 0.0
          %1214 = vmatpush2.msra.mxu0 0.0
          %1215 = vmatprep.subr.mxu0 0.0
          %1216 = vmatpush2.msra.mxu0 0.0
          %1217 = vmatprep.subr.mxu0 0.0
          %1218 = vmatpush2.msra.mxu0 0.0
          %1219 = vmatprep.mubr.f32.mxu0 0.0
          %1220 = vmatmul.mubr.f32.gmra.mxu0 %v1153
          %v1221 = vpop.f32.mrf.mxu0
          %v1222 = vadd.f32 0.0, %v1221
          %v1223 = vpop.f32.mrf.mxu0
          %1224 = vdwg.mxu0
          %v1225 = vmax.f32 %v1222, 0.0
          %v1226 = vadd.f32 %v1151, %v1225
          %v1227 = vld [vmem:[%s2] sm:$0x3]
          %vm1228 = vcmask 15360
          %v1230 = vsel %vm1228, %v1226, 0
          %vm1232 = vcmask 1041408
          %v1234 = vsel %vm1232, %v1227, 0
          %1236 = vmatprep.subr.mxu0 0.0
          %1237 = vmatpush1.msra.mxu0 0.0
          %1238 = vmatprep.subr.mxu0 0.0
          %1239 = vmatpush1.msra.mxu0 0.0
          %1240 = vmatprep.subr.mxu0 0.0
          %1241 = vmatpush1.msra.mxu0 0.0
          %1242 = vmatprep.subr.mxu0 0.0
          %1243 = vmatpush1.msra.mxu0 0.0
          %1244 = vmatprep.subr.mxu0 0.0
          %1245 = vmatpush1.msra.mxu0 0.0
          %1246 = vmatprep.subr.mxu0 0.0
          %1247 = vmatpush1.msra.mxu0 0.0
          %1248 = vmatprep.subr.mxu0 0.0
          %1249 = vmatpush1.msra.mxu0 0.0
          %1250 = vmatprep.subr.mxu0 0.0
          %1251 = vmatpush1.msra.mxu0 0.0
          %1252 = vmatprep.subr.mxu0 0.0
          %1253 = vmatpush1.msra.mxu0 0.0
          %1254 = vmatprep.subr.mxu0 0.0
          %1255 = vmatpush1.msra.mxu0 0.0
          %1256 = vmatprep.subr.mxu0 0.0
          %1257 = vmatpush1.msra.mxu0 0.0
          %1258 = vmatprep.subr.mxu0 0.0
          %1259 = vmatpush1.msra.mxu0 0.0
          %1260 = vmatprep.subr.mxu0 0.0
          %1261 = vmatpush1.msra.mxu0 0.0
          %1262 = vmatprep.subr.mxu0 0.0
          %1263 = vmatpush1.msra.mxu0 0.0
          %1264 = vmatprep.subr.mxu0 0.0
          %1265 = vmatpush1.msra.mxu0 0.0
          %1266 = vmatprep.subr.mxu0 0.0
          %1267 = vmatpush1.msra.mxu0 %v1234
          %1268 = vmatprep.subr.mxu0 0.0
          %1269 = vmatpush2.msra.mxu0 0.0
          %1270 = vmatprep.subr.mxu0 0.0
          %1271 = vmatpush2.msra.mxu0 0.0
          %1272 = vmatprep.subr.mxu0 0.0
          %1273 = vmatpush2.msra.mxu0 0.0
          %1274 = vmatprep.subr.mxu0 0.0
          %1275 = vmatpush2.msra.mxu0 0.0
          %1276 = vmatprep.subr.mxu0 0.0
          %1277 = vmatpush2.msra.mxu0 0.0
          %1278 = vmatprep.subr.mxu0 0.0
          %1279 = vmatpush2.msra.mxu0 0.0
          %1280 = vmatprep.subr.mxu0 0.0
          %1281 = vmatpush2.msra.mxu0 0.0
          %1282 = vmatprep.subr.mxu0 0.0
          %1283 = vmatpush2.msra.mxu0 0.0
          %1284 = vmatprep.subr.mxu0 0.0
          %1285 = vmatpush2.msra.mxu0 0.0
          %1286 = vmatprep.subr.mxu0 0.0
          %1287 = vmatpush2.msra.mxu0 0.0
          %1288 = vmatprep.subr.mxu0 0.0
          %1289 = vmatpush2.msra.mxu0 0.0
          %1290 = vmatprep.subr.mxu0 0.0
          %1291 = vmatpush2.msra.mxu0 0.0
          %1292 = vmatprep.subr.mxu0 0.0
          %1293 = vmatpush2.msra.mxu0 0.0
          %1294 = vmatprep.subr.mxu0 0.0
          %1295 = vmatpush2.msra.mxu0 0.0
          %1296 = vmatprep.subr.mxu0 0.0
          %1297 = vmatpush2.msra.mxu0 0.0
          %1298 = vmatprep.subr.mxu0 0.0
          %1299 = vmatpush2.msra.mxu0 0.0
          %1300 = vmatprep.mubr.f32.mxu0 0.0
          %1301 = vmatmul.mubr.f32.gmra.mxu0 %v1230
          %v1302 = vpop.f32.mrf.mxu0
          %v1303 = vadd.f32 0.0, %v1302
          %v1304 = vpop.f32.mrf.mxu0
          %1305 = vdwg.mxu0
          %v1306 = vxor.u32 %v1303, 2147483648
          %v1307 = vmul.f32 %v1306, 1.442695
          %v1308 = vpow.pop %v1307
          %v1309 = vadd.f32 %v1308, 1.0
          %v1310 = vrcp.pop %v1309
          %v1311 = vmul.f32 1.0, %v1310
          %vm1312 = vcmask 253952
          %1313 = vst.msk [vmem:[%s203] sm:$0x1] %vm1312, %v1311
        $region48: #{tpu_custom_call.1} parent=31 // pred_fallthru
          _
        %s1314 = sand.u32 %s110, 1
        %s1315 = scalar_lea.sflag [#allocation6], %s1314
        %s1316 = sand.u32 %s110, 1
        %s1317 = scalar_lea.vmem [#allocation7], %s1316
        // Predicated region
        $region49: #{tpu_custom_call.1} parent=31 // pred_check
          %p1318 = pneg %p120
        $region50: #{tpu_custom_call.1} parent=31 // pred_check_branch
          %1320 = sbr.rel (%p1318) target = $region52
        $region51: #{tpu_custom_call.1} parent=31 // pred_region
          %s1322 = ssub.s32 16, 16
          %1323 = vsyncadd %s1315, %s1322
          %s1324 = smul.addr %s24, 16
          %s1325 = scalar_lea.hbm %s3, %s1324
          %s1327 = sshll.u32 %s1317, 4
          %s1328 = int_to_ptr.vmem [resolvable:$true] %s1327
          %1330 = dma.vmem_to_hbm [thread:$0]  %s1328, 16, %s1325, %s1315
        $region52: #{tpu_custom_call.1} parent=31 // pred_fallthru
          _
      $region32: #{tpu_custom_call.1} parent=5 // pred_fallthru
        _
      %p1331 = scmp.le.s32.totalorder 2, %s15
      // Predicated region
      $region53: #{tpu_custom_call.1} parent=5 // pred_check
        %p1332 = pneg %p1331
      $region54: #{tpu_custom_call.1} parent=5 // pred_check_branch
        %1334 = sbr.rel (%p1332) target = $region56
      $region55: #{tpu_custom_call.1} parent=5 // pred_region
        %s1335 = ssub.s32 %s15, 2
        // Predicated region
        $region57: #{tpu_custom_call.1} parent=55 // pred_check
          %p1336 = pneg %p126
        $region58: #{tpu_custom_call.1} parent=55 // pred_check_branch
          %1338 = sbr.rel (%p1336) target = $region60
        $region59: #{tpu_custom_call.1} parent=55 // pred_region
          %s1339 = sand.u32 %s111, 1
          %s1340 = scalar_lea.sflag [#allocation6], %s1339
          %s1341 = sand.u32 %s111, 1
          %s1342 = scalar_lea.vmem [#allocation7], %s1341
          %1343 = dma.done %s1340, 16
        $region60: #{tpu_custom_call.1} parent=55 // pred_fallthru
          _
      $region56: #{tpu_custom_call.1} parent=5 // pred_fallthru
        _
    $region6: #{tpu_custom_call.1} parent=1 // loop_footer
      %s19 = sadd.s32 1, %s15
    $region7: #{tpu_custom_call.1} parent=1 // loop_footer_branch
      %14 = sbr.rel target = $region3
    $region8: #{tpu_custom_call.1} parent=1 // loop_exit
      _
    %1344 = vsyncpa [#allocation5], 1
    %s1345 = scalar_lea.sflag [#allocation5], 1
    %1346 = vsyncpa %s1345, 1
    %1347 = vsyncpa [#allocation6], 1
    %s1348 = scalar_lea.sflag [#allocation6], 1
    %1349 = vsyncpa %s1348, 1

</llo_original>
